<compile_context>
chip_gen: v7x
topology: tpu7x:2x2x1
jax: 0.10.0
libtpu: 0.0.40
codegen_flags: <defaults>
</compile_context>

<pallas_src>
import functools

import jax
import jax.numpy as jnp
from jax.experimental import pallas as pl
from jax.experimental.pallas import tpu as pltpu

STATE_SIZE = 33
ACTION_SIZE = 4
HIDDEN_UNITS = (128, 128, 64, 64)
UPPER_BOUND = 1.0
TILE_B = 1024      # max batch rows per grid step (kernel is mem/overhead bound)


def _cdiv(a, b):
    return -(-a // b)


def _round_up(x, m):
    return _cdiv(x, m) * m


# ---------------------------------------------------------------------------
# Kernel: fused 5-layer MLP  4 x (matmul+bias+ReLU) -> matmul+bias -> tanh*bound
# ---------------------------------------------------------------------------
def _actor_kernel(x_ref,
                  w1_ref, b1_ref,
                  w2_ref, b2_ref,
                  w3_ref, b3_ref,
                  w4_ref, b4_ref,
                  w5_ref, b5_ref,
                  out_ref,
                  *, upper_bound):

    def hidden(h, w_ref, b_ref):
        # bf16 MXU matmul with f32 accumulation; bias-add + ReLU in f32, then the
        # chained activation is kept in bf16 (identical math to casting at the
        # next matmul input, but halves activation VMEM bytes).
        y = jnp.dot(h, w_ref[...], preferred_element_type=jnp.float32) + b_ref[...]
        return jnp.maximum(y, 0.0).astype(jnp.bfloat16)

    h = x_ref[...]                                   # (tile_b, 33) bf16
    h = hidden(h, w1_ref, b1_ref)
    h = hidden(h, w2_ref, b2_ref)
    h = hidden(h, w3_ref, b3_ref)
    h = hidden(h, w4_ref, b4_ref)
    o = jnp.dot(h, w5_ref[...], preferred_element_type=jnp.float32) + b5_ref[...]
    o = jnp.tanh(o)
    if upper_bound != 1.0:                           # trace-time constant
        o = o * upper_bound
    out_ref[...] = o.astype(out_ref.dtype)


# ---------------------------------------------------------------------------
# Parameter preparation (done once; bf16 weights, f32 row-vector biases)
# ---------------------------------------------------------------------------
def prepare_params(params, weight_dtype=jnp.bfloat16):
    prepped = []
    for w, b in params:
        w = jnp.asarray(w, jnp.float32).astype(weight_dtype)
        b = jnp.asarray(b, jnp.float32).reshape(1, -1)
        prepped.append((w, b))
    return prepped


# ---------------------------------------------------------------------------
# Forward wrapper
# ---------------------------------------------------------------------------
@functools.partial(jax.jit, static_argnames=("upper_bound", "tile_b"))
def ddpg_actor_forward(state, prepped_params, upper_bound=UPPER_BOUND,
                       tile_b=TILE_B):
    """state: (batch, state_size).  prepped_params: output of prepare_params."""
    batch, state_size = state.shape
    action_size = prepped_params[-1][0].shape[1]

    # Batch tile: as large as possible, but capped so the grid has >= 2 steps
    # whenever the batch allows it (v7x: 2 TCs shard the "parallel" axis).
    tile_eff = min(tile_b, _round_up(_cdiv(batch, 2), 8))
    b_pad = _round_up(batch, tile_eff)

    # Stream the state in bf16; no feature-dim padding (K=33 handled by Mosaic).
    x = state.astype(jnp.bfloat16)
    if b_pad != batch:
        x = jnp.pad(x, ((0, b_pad - batch), (0, 0)))

    flat_inputs = [x]
    in_specs = [pl.BlockSpec((tile_eff, state_size), lambda i: (i, 0))]
    for w, b in prepped_params:
        flat_inputs += [w, b]
        # Constant index_maps -> weights/biases DMA'd once, VMEM-resident.
        in_specs += [pl.BlockSpec(w.shape, lambda i: (0, 0)),
                     pl.BlockSpec(b.shape, lambda i: (0, 0))]

    out = pl.pallas_call(
        functools.partial(_actor_kernel, upper_bound=upper_bound),
        grid=(b_pad // tile_eff,),
        in_specs=in_specs,
        out_specs=pl.BlockSpec((tile_eff, action_size), lambda i: (i, 0)),
        out_shape=jax.ShapeDtypeStruct((b_pad, action_size), jnp.float32),
        compiler_params=pltpu.CompilerParams(
            dimension_semantics=("parallel",)),      # batch tiles -> both TCs on v7x
    )(*flat_inputs)

    return out[:batch]


# ---------------------------------------------------------------------------
# Init mirroring DDPGActor.reset_parameters
# ---------------------------------------------------------------------------
def init_params(key, state_size=STATE_SIZE, action_size=ACTION_SIZE,
                hidden_units=HIDDEN_UNITS):
    """hidden layers: weight ~ U(-1/sqrt(out_features), 1/sqrt(out_features))
       (torch code uses weight.size()[0] == out_features),
       last layer:    weight ~ U(-3e-3, 3e-3),
       biases keep nn.Linear's default U(-1/sqrt(in_features), 1/sqrt(in_features))."""
    sizes = [state_size] + list(hidden_units) + [action_size]
    params = []
    n_layers = len(sizes) - 1
    for i in range(n_layers):
        fan_in, fan_out = sizes[i], sizes[i + 1]
        key, kw, kb = jax.random.split(key, 3)
        lim_w = 3e-3 if i == n_layers - 1 else float(1.0 / jnp.sqrt(jnp.float32(fan_out)))
        w = jax.random.uniform(kw, (fan_in, fan_out), jnp.float32,
                               minval=-lim_w, maxval=lim_w)
        lim_b = float(1.0 / jnp.sqrt(jnp.float32(fan_in)))
        b = jax.random.uniform(kb, (1, fan_out), jnp.float32,
                               minval=-lim_b, maxval=lim_b)
        params.append((w, b))
    return params


# ---------------------------------------------------------------------------
# References
# ---------------------------------------------------------------------------
def _reference_forward_f32(state, params, upper_bound=UPPER_BOUND):
    x = state
    for i, (w, b) in enumerate(params):
        y = x @ w + b
        if i == len(params) - 1:
            return jnp.tanh(y) * upper_bound
        x = jnp.maximum(y, 0.0)


def _reference_forward_quantized(state, prepped, upper_bound=UPPER_BOUND):
    """Same bf16-input / bf16-weight / f32-accumulation math as the kernel."""
    x = state.astype(jnp.bfloat16)
    n = len(prepped)
    for i, (w, b) in enumerate(prepped):
        y = jnp.dot(x, w, preferred_element_type=jnp.float32) + b
        if i == n - 1:
            return jnp.tanh(y) * upper_bound
        x = jnp.maximum(y, 0.0).astype(jnp.bfloat16)


# ---------------------------------------------------------------------------
if __name__ == "__main__":
    key = jax.random.PRNGKey(0)
    key, k_a, k_b = jax.random.split(key, 3)

    params = init_params(key)
    prepped = prepare_params(params)

    # Small batch exercising a 2-step grid (tile_eff = 32, 2 tiles).
    state_a = jax.random.normal(k_a, (64, STATE_SIZE), jnp.float32)
    out_a = jax.block_until_ready(ddpg_actor_forward(state_a, prepped))

    # Ragged batch exercising row padding (tile_eff = 8, b_pad = 16, 2 tiles).
    state_b = jax.random.normal(k_b, (9, STATE_SIZE), jnp.float32)
    out_b = jax.block_until_ready(ddpg_actor_forward(state_b, prepped))

    assert out_a.shape == (64, ACTION_SIZE)
    assert out_b.shape == (9, ACTION_SIZE)

    # Exact-math check against a plain-JAX reference using the same bf16 params.
    ref_a_q = _reference_forward_quantized(state_a, prepped)
    ref_b_q = _reference_forward_quantized(state_b, prepped)
    assert jnp.allclose(out_a, ref_a_q, atol=2e-3, rtol=2e-3)
    assert jnp.allclose(out_b, ref_b_q, atol=2e-3, rtol=2e-3)

    # Semantic check against the original f32 module math (loose: bf16 quant).
    ref_a_f = _reference_forward_f32(state_a, params)
    ref_b_f = _reference_forward_f32(state_b, params)
    assert jnp.allclose(out_a, ref_a_f, atol=3e-2, rtol=3e-2)
    assert jnp.allclose(out_b, ref_b_f, atol=3e-2, rtol=3e-2)

    print("KERNEL_OK")
</pallas_src>

<mosaic_0001>
module attributes {stable_mosaic.version = 11 : i64} {
  func.func @_actor_kernel(%arg0: i32, %arg1: memref<32x33xbf16, #tpu.memory_space<vmem>>, %arg2: memref<33x128xbf16, #tpu.memory_space<vmem>>, %arg3: memref<1x128xf32, #tpu.memory_space<vmem>>, %arg4: memref<128x128xbf16, #tpu.memory_space<vmem>>, %arg5: memref<1x128xf32, #tpu.memory_space<vmem>>, %arg6: memref<128x64xbf16, #tpu.memory_space<vmem>>, %arg7: memref<1x64xf32, #tpu.memory_space<vmem>>, %arg8: memref<64x64xbf16, #tpu.memory_space<vmem>>, %arg9: memref<1x64xf32, #tpu.memory_space<vmem>>, %arg10: memref<64x4xbf16, #tpu.memory_space<vmem>>, %arg11: memref<1x4xf32, #tpu.memory_space<vmem>>, %arg12: memref<32x4xf32, #tpu.memory_space<vmem>>) attributes {dimension_semantics = [#tpu.dimension_semantics<parallel>], iteration_bounds = array<i64: 2>, scalar_prefetch = 0 : i64, scratch_operands = 0 : i64, tpu.core_type = #tpu.core_type<tc>, window_params = [{transform_indices = @transform_0, window_bounds = array<i64: 32, 33>}, {pipeline_mode = #tpu.pipeline_mode<synchronous>, transform_indices = @transform_1, window_bounds = array<i64: 33, 128>}, {pipeline_mode = #tpu.pipeline_mode<synchronous>, transform_indices = @transform_2, window_bounds = array<i64: 1, 128>}, {pipeline_mode = #tpu.pipeline_mode<synchronous>, transform_indices = @transform_3, window_bounds = array<i64: 128, 128>}, {pipeline_mode = #tpu.pipeline_mode<synchronous>, transform_indices = @transform_4, window_bounds = array<i64: 1, 128>}, {pipeline_mode = #tpu.pipeline_mode<synchronous>, transform_indices = @transform_5, window_bounds = array<i64: 128, 64>}, {pipeline_mode = #tpu.pipeline_mode<synchronous>, transform_indices = @transform_6, window_bounds = array<i64: 1, 64>}, {pipeline_mode = #tpu.pipeline_mode<synchronous>, transform_indices = @transform_7, window_bounds = array<i64: 64, 64>}, {pipeline_mode = #tpu.pipeline_mode<synchronous>, transform_indices = @transform_8, window_bounds = array<i64: 1, 64>}, {pipeline_mode = #tpu.pipeline_mode<synchronous>, transform_indices = @transform_9, window_bounds = array<i64: 64, 4>}, {pipeline_mode = #tpu.pipeline_mode<synchronous>, transform_indices = @transform_10, window_bounds = array<i64: 1, 4>}, {transform_indices = @transform_11, window_bounds = array<i64: 32, 4>}]} {
    %c0 = arith.constant 0 : index
    %c0_0 = arith.constant 0 : index
    %0 = vector.load %arg1[%c0, %c0_0] : memref<32x33xbf16, #tpu.memory_space<vmem>>, vector<32x33xbf16>
    %c0_1 = arith.constant 0 : index
    %c0_2 = arith.constant 0 : index
    %1 = vector.load %arg2[%c0_1, %c0_2] : memref<33x128xbf16, #tpu.memory_space<vmem>>, vector<33x128xbf16>
    %cst = arith.constant dense<0.000000e+00> : vector<32x128xf32>
    %2 = tpu.matmul %0, %1, %cst {dimension_numbers = #tpu.dot_dimension_numbers<[1], [0], [0], [1], [0, 0, 1, 1], [], []>} : vector<32x33xbf16>, vector<33x128xbf16>, vector<32x128xf32> -> vector<32x128xf32>
    %c0_3 = arith.constant 0 : index
    %c0_4 = arith.constant 0 : index
    %3 = vector.load %arg3[%c0_3, %c0_4] : memref<1x128xf32, #tpu.memory_space<vmem>>, vector<1x128xf32>
    %4 = vector.broadcast %3 : vector<1x128xf32> to vector<32x128xf32>
    %5 = arith.addf %2, %4 : vector<32x128xf32>
    %cst_5 = arith.constant 0.000000e+00 : f32
    %6 = vector.broadcast %cst_5 : f32 to vector<32x128xf32>
    %7 = arith.maximumf %5, %6 : vector<32x128xf32>
    %8 = arith.truncf %7 : vector<32x128xf32> to vector<32x128xbf16>
    %c0_6 = arith.constant 0 : index
    %c0_7 = arith.constant 0 : index
    %9 = vector.load %arg4[%c0_6, %c0_7] : memref<128x128xbf16, #tpu.memory_space<vmem>>, vector<128x128xbf16>
    %cst_8 = arith.constant dense<0.000000e+00> : vector<32x128xf32>
    %10 = tpu.matmul %8, %9, %cst_8 {dimension_numbers = #tpu.dot_dimension_numbers<[1], [0], [0], [1], [0, 0, 1, 1], [], []>} : vector<32x128xbf16>, vector<128x128xbf16>, vector<32x128xf32> -> vector<32x128xf32>
    %c0_9 = arith.constant 0 : index
    %c0_10 = arith.constant 0 : index
    %11 = vector.load %arg5[%c0_9, %c0_10] : memref<1x128xf32, #tpu.memory_space<vmem>>, vector<1x128xf32>
    %12 = vector.broadcast %11 : vector<1x128xf32> to vector<32x128xf32>
    %13 = arith.addf %10, %12 : vector<32x128xf32>
    %cst_11 = arith.constant 0.000000e+00 : f32
    %14 = vector.broadcast %cst_11 : f32 to vector<32x128xf32>
    %15 = arith.maximumf %13, %14 : vector<32x128xf32>
    %16 = arith.truncf %15 : vector<32x128xf32> to vector<32x128xbf16>
    %c0_12 = arith.constant 0 : index
    %c0_13 = arith.constant 0 : index
    %17 = vector.load %arg6[%c0_12, %c0_13] : memref<128x64xbf16, #tpu.memory_space<vmem>>, vector<128x64xbf16>
    %cst_14 = arith.constant dense<0.000000e+00> : vector<32x64xf32>
    %18 = tpu.matmul %16, %17, %cst_14 {dimension_numbers = #tpu.dot_dimension_numbers<[1], [0], [0], [1], [0, 0, 1, 1], [], []>} : vector<32x128xbf16>, vector<128x64xbf16>, vector<32x64xf32> -> vector<32x64xf32>
    %c0_15 = arith.constant 0 : index
    %c0_16 = arith.constant 0 : index
    %19 = vector.load %arg7[%c0_15, %c0_16] : memref<1x64xf32, #tpu.memory_space<vmem>>, vector<1x64xf32>
    %20 = vector.broadcast %19 : vector<1x64xf32> to vector<32x64xf32>
    %21 = arith.addf %18, %20 : vector<32x64xf32>
    %cst_17 = arith.constant 0.000000e+00 : f32
    %22 = vector.broadcast %cst_17 : f32 to vector<32x64xf32>
    %23 = arith.maximumf %21, %22 : vector<32x64xf32>
    %24 = arith.truncf %23 : vector<32x64xf32> to vector<32x64xbf16>
    %c0_18 = arith.constant 0 : index
    %c0_19 = arith.constant 0 : index
    %25 = vector.load %arg8[%c0_18, %c0_19] : memref<64x64xbf16, #tpu.memory_space<vmem>>, vector<64x64xbf16>
    %cst_20 = arith.constant dense<0.000000e+00> : vector<32x64xf32>
    %26 = tpu.matmul %24, %25, %cst_20 {dimension_numbers = #tpu.dot_dimension_numbers<[1], [0], [0], [1], [0, 0, 1, 1], [], []>} : vector<32x64xbf16>, vector<64x64xbf16>, vector<32x64xf32> -> vector<32x64xf32>
    %c0_21 = arith.constant 0 : index
    %c0_22 = arith.constant 0 : index
    %27 = vector.load %arg9[%c0_21, %c0_22] : memref<1x64xf32, #tpu.memory_space<vmem>>, vector<1x64xf32>
    %28 = vector.broadcast %27 : vector<1x64xf32> to vector<32x64xf32>
    %29 = arith.addf %26, %28 : vector<32x64xf32>
    %cst_23 = arith.constant 0.000000e+00 : f32
    %30 = vector.broadcast %cst_23 : f32 to vector<32x64xf32>
    %31 = arith.maximumf %29, %30 : vector<32x64xf32>
    %32 = arith.truncf %31 : vector<32x64xf32> to vector<32x64xbf16>
    %c0_24 = arith.constant 0 : index
    %c0_25 = arith.constant 0 : index
    %33 = vector.load %arg10[%c0_24, %c0_25] : memref<64x4xbf16, #tpu.memory_space<vmem>>, vector<64x4xbf16>
    %cst_26 = arith.constant dense<0.000000e+00> : vector<32x4xf32>
    %34 = tpu.matmul %32, %33, %cst_26 {dimension_numbers = #tpu.dot_dimension_numbers<[1], [0], [0], [1], [0, 0, 1, 1], [], []>} : vector<32x64xbf16>, vector<64x4xbf16>, vector<32x4xf32> -> vector<32x4xf32>
    %c0_27 = arith.constant 0 : index
    %c0_28 = arith.constant 0 : index
    %35 = vector.load %arg11[%c0_27, %c0_28] : memref<1x4xf32, #tpu.memory_space<vmem>>, vector<1x4xf32>
    %36 = vector.broadcast %35 : vector<1x4xf32> to vector<32x4xf32>
    %37 = arith.addf %34, %36 : vector<32x4xf32>
    %38 = math.tanh %37 : vector<32x4xf32>
    %c0_29 = arith.constant 0 : index
    %c0_30 = arith.constant 0 : index
    %39 = vector.load %arg12[%c0_29, %c0_30] : memref<32x4xf32, #tpu.memory_space<vmem>>, vector<32x4xf32>
    tpu.vector_store %arg12[%c0_29, %c0_30], %38 {strides = array<i32>} : memref<32x4xf32, #tpu.memory_space<vmem>>, vector<32x4xf32>,
    return
  }
  func.func @transform_0(%arg0: i32) -> (i32, i32) {
    %c0_i32 = arith.constant 0 : i32
    %c0_i32_0 = arith.constant 0 : i32
    return %arg0, %c0_i32 : i32, i32
  }
  func.func @transform_1(%arg0: i32) -> (i32, i32) {
    %c0_i32 = arith.constant 0 : i32
    %c0_i32_0 = arith.constant 0 : i32
    %c0_i32_1 = arith.constant 0 : i32
    return %c0_i32, %c0_i32_0 : i32, i32
  }
  func.func @transform_2(%arg0: i32) -> (i32, i32) {
    %c0_i32 = arith.constant 0 : i32
    %c0_i32_0 = arith.constant 0 : i32
    %c0_i32_1 = arith.constant 0 : i32
    return %c0_i32, %c0_i32_0 : i32, i32
  }
  func.func @transform_3(%arg0: i32) -> (i32, i32) {
    %c0_i32 = arith.constant 0 : i32
    %c0_i32_0 = arith.constant 0 : i32
    %c0_i32_1 = arith.constant 0 : i32
    return %c0_i32, %c0_i32_0 : i32, i32
  }
  func.func @transform_4(%arg0: i32) -> (i32, i32) {
    %c0_i32 = arith.constant 0 : i32
    %c0_i32_0 = arith.constant 0 : i32
    %c0_i32_1 = arith.constant 0 : i32
    return %c0_i32, %c0_i32_0 : i32, i32
  }
  func.func @transform_5(%arg0: i32) -> (i32, i32) {
    %c0_i32 = arith.constant 0 : i32
    %c0_i32_0 = arith.constant 0 : i32
    %c0_i32_1 = arith.constant 0 : i32
    return %c0_i32, %c0_i32_0 : i32, i32
  }
  func.func @transform_6(%arg0: i32) -> (i32, i32) {
    %c0_i32 = arith.constant 0 : i32
    %c0_i32_0 = arith.constant 0 : i32
    %c0_i32_1 = arith.constant 0 : i32
    return %c0_i32, %c0_i32_0 : i32, i32
  }
  func.func @transform_7(%arg0: i32) -> (i32, i32) {
    %c0_i32 = arith.constant 0 : i32
    %c0_i32_0 = arith.constant 0 : i32
    %c0_i32_1 = arith.constant 0 : i32
    return %c0_i32, %c0_i32_0 : i32, i32
  }
  func.func @transform_8(%arg0: i32) -> (i32, i32) {
    %c0_i32 = arith.constant 0 : i32
    %c0_i32_0 = arith.constant 0 : i32
    %c0_i32_1 = arith.constant 0 : i32
    return %c0_i32, %c0_i32_0 : i32, i32
  }
  func.func @transform_9(%arg0: i32) -> (i32, i32) {
    %c0_i32 = arith.constant 0 : i32
    %c0_i32_0 = arith.constant 0 : i32
    %c0_i32_1 = arith.constant 0 : i32
    return %c0_i32, %c0_i32_0 : i32, i32
  }
  func.func @transform_10(%arg0: i32) -> (i32, i32) {
    %c0_i32 = arith.constant 0 : i32
    %c0_i32_0 = arith.constant 0 : i32
    %c0_i32_1 = arith.constant 0 : i32
    return %c0_i32, %c0_i32_0 : i32, i32
  }
  func.func @transform_11(%arg0: i32) -> (i32, i32) {
    %c0_i32 = arith.constant 0 : i32
    %c0_i32_0 = arith.constant 0 : i32
    return %arg0, %c0_i32 : i32, i32
  }
}

</mosaic_0001>

<llo_original>
// kernel: ddpg_actor_forward.1
$region0: #{ddpg_actor_forward.1}
  #allocation0 [shape = 'u32[]', space=smem, size = 0x4, offset = 0x4, fixed_abs, tag = 'smem constant byte address 0x4 - core index']
  #allocation1 [shape = 'u32[144,128]{1,0:T(1,128)}', space=vmem, size = 0x12000, scoped, tag = 'internal scratch']
  %s0 = inlined_call_operand.vmem [shape: bf16[64,33], index: 0, kind: input, shape index: {}]
  %s1 = inlined_call_operand.vmem [shape: bf16[33,128], index: 1, kind: input, shape index: {}]
  %s2 = inlined_call_operand.vmem [shape: f32[1,128], index: 2, kind: input, shape index: {}]
  %s3 = inlined_call_operand.vmem [shape: bf16[128,128], index: 3, kind: input, shape index: {}]
  %s4 = inlined_call_operand.vmem [shape: f32[1,128], index: 4, kind: input, shape index: {}]
  %s5 = inlined_call_operand.vmem [shape: bf16[128,64], index: 5, kind: input, shape index: {}]
  %s6 = inlined_call_operand.vmem [shape: f32[1,64], index: 6, kind: input, shape index: {}]
  %s7 = inlined_call_operand.vmem [shape: bf16[64,64], index: 7, kind: input, shape index: {}]
  %s8 = inlined_call_operand.vmem [shape: f32[1,64], index: 8, kind: input, shape index: {}]
  %s9 = inlined_call_operand.vmem [shape: bf16[64,4], index: 9, kind: input, shape index: {}]
  %s10 = inlined_call_operand.vmem [shape: f32[1,4], index: 10, kind: input, shape index: {}]
  %s11 = inlined_call_operand.vmem [shape: f32[64,4], index: 11, kind: output, shape index: {}]
  %s12 = sld [smem:[#allocation0]]
  $region77: #{ddpg_actor_forward.1} parent=0
    _
  %s14 = ssub.s32 1, %s12
  %s15 = scalar_select 0, %s14, %s12
  loop: start=0, step=1, limit=4
  $region2: #{ddpg_actor_forward.1} parent=0 // loop_pre_header
    _
  $region3: #{ddpg_actor_forward.1} parent=0 // loop_header
    %s17 = sphi 0, %s21
    %p18 = scmp.ge.s32.totalorder %s17, 4
    %s27 = sphi 0, %s29
    %s30 = sphi 0, %s27
    %s31 = sphi 0, %s30
    %s47 = sphi 0, %s31
    %s51 = sphi 0, %s51
    %s53 = sphi 0, %s51
    %s54 = sphi 0, %s53
    %s68 = sphi 0, %s54
    %s72 = sphi 0, %s72
    %s74 = sphi 0, %s72
    %s75 = sphi 0, %s74
    %s89 = sphi 0, %s75
    %s93 = sphi 0, %s93
    %s95 = sphi 0, %s93
    %s96 = sphi 0, %s95
    %s110 = sphi 0, %s96
    %s114 = sphi 0, %s114
    %s116 = sphi 0, %s114
    %s117 = sphi 0, %s116
    %s131 = sphi 0, %s117
    %s135 = sphi 0, %s135
    %s137 = sphi 0, %s135
    %s138 = sphi 0, %s137
    %s152 = sphi 0, %s138
    %s156 = sphi 0, %s156
    %s158 = sphi 0, %s156
    %s159 = sphi 0, %s158
    %s173 = sphi 0, %s159
    %s177 = sphi 0, %s177
    %s179 = sphi 0, %s177
    %s180 = sphi 0, %s179
    %s194 = sphi 0, %s180
    %s198 = sphi 0, %s198
    %s200 = sphi 0, %s198
    %s201 = sphi 0, %s200
    %s215 = sphi 0, %s201
    %s219 = sphi 0, %s219
    %s221 = sphi 0, %s219
    %s222 = sphi 0, %s221
    %s236 = sphi 0, %s222
    %s240 = sphi 0, %s240
    %s242 = sphi 0, %s240
    %s243 = sphi 0, %s242
    %s257 = sphi 0, %s243
    %s263 = sphi 0, %s265
    %s266 = sphi 0, %s263
    %s267 = sphi 0, %s266
    %s283 = sphi 0, %s267
  $region4: #{ddpg_actor_forward.1} parent=0 // loop_header_branch
    %20 = sbr.rel (%p18) target = $region8
  $region5: #{ddpg_actor_forward.1} parent=0 // loop_body
    %s22 = ssub.s32 %s17, 1
    %s23 = ssub.s32 %s17, 2
    %s24 = sadd.s32 %s17, 1
    %s25 = ssub.s32 %s17, %s24
    %p26 = scmp.eq.s32.totalorder %s25, 0
    %s28 = sadd.s32 %s27, 1
    %s29 = scalar_select %p26, %s27, %s28
    %p32 = pneg %p26
    %p33 = scmp.eq.s32.totalorder %s17, 1
    %p34 = por %p32, %p33
    %p35 = scmp.ne.s32.totalorder %s27, %s30
    %p36 = scmp.eq.s32.totalorder %s17, 0
    %p37 = por %p35, %p36
    %p38 = scmp.ne.s32.totalorder %s27, %s30
    %p39 = scmp.eq.s32.totalorder %s22, 1
    %p40 = por %p38, %p39
    %p41 = scmp.ne.s32.totalorder %s30, %s31
    %p42 = scmp.eq.s32.totalorder %s22, 0
    %p43 = por %p41, %p42
    %p44 = scmp.ne.s32.totalorder %s30, %s31
    %p45 = scmp.eq.s32.totalorder %s23, 1
    %p46 = por %p44, %p45
    %p48 = scmp.ne.s32.totalorder %s31, %s47
    %p49 = scmp.eq.s32.totalorder %s23, 0
    %p50 = por %p48, %p49
    %s52 = sadd.s32 %s51, 1
    %p55 = scmp.eq.s32.totalorder %s17, 1
    %p56 = scmp.ne.s32.totalorder %s51, %s53
    %p57 = scmp.eq.s32.totalorder %s17, 0
    %p58 = por %p56, %p57
    %p59 = scmp.ne.s32.totalorder %s51, %s53
    %p60 = scmp.eq.s32.totalorder %s22, 1
    %p61 = por %p59, %p60
    %p62 = scmp.ne.s32.totalorder %s53, %s54
    %p63 = scmp.eq.s32.totalorder %s22, 0
    %p64 = por %p62, %p63
    %p65 = scmp.ne.s32.totalorder %s53, %s54
    %p66 = scmp.eq.s32.totalorder %s23, 1
    %p67 = por %p65, %p66
    %p69 = scmp.ne.s32.totalorder %s54, %s68
    %p70 = scmp.eq.s32.totalorder %s23, 0
    %p71 = por %p69, %p70
    %s73 = sadd.s32 %s72, 1
    %p76 = scmp.eq.s32.totalorder %s17, 1
    %p77 = scmp.ne.s32.totalorder %s72, %s74
    %p78 = scmp.eq.s32.totalorder %s17, 0
    %p79 = por %p77, %p78
    %p80 = scmp.ne.s32.totalorder %s72, %s74
    %p81 = scmp.eq.s32.totalorder %s22, 1
    %p82 = por %p80, %p81
    %p83 = scmp.ne.s32.totalorder %s74, %s75
    %p84 = scmp.eq.s32.totalorder %s22, 0
    %p85 = por %p83, %p84
    %p86 = scmp.ne.s32.totalorder %s74, %s75
    %p87 = scmp.eq.s32.totalorder %s23, 1
    %p88 = por %p86, %p87
    %p90 = scmp.ne.s32.totalorder %s75, %s89
    %p91 = scmp.eq.s32.totalorder %s23, 0
    %p92 = por %p90, %p91
    %s94 = sadd.s32 %s93, 1
    %p97 = scmp.eq.s32.totalorder %s17, 1
    %p98 = scmp.ne.s32.totalorder %s93, %s95
    %p99 = scmp.eq.s32.totalorder %s17, 0
    %p100 = por %p98, %p99
    %p101 = scmp.ne.s32.totalorder %s93, %s95
    %p102 = scmp.eq.s32.totalorder %s22, 1
    %p103 = por %p101, %p102
    %p104 = scmp.ne.s32.totalorder %s95, %s96
    %p105 = scmp.eq.s32.totalorder %s22, 0
    %p106 = por %p104, %p105
    %p107 = scmp.ne.s32.totalorder %s95, %s96
    %p108 = scmp.eq.s32.totalorder %s23, 1
    %p109 = por %p107, %p108
    %p111 = scmp.ne.s32.totalorder %s96, %s110
    %p112 = scmp.eq.s32.totalorder %s23, 0
    %p113 = por %p111, %p112
    %s115 = sadd.s32 %s114, 1
    %p118 = scmp.eq.s32.totalorder %s17, 1
    %p119 = scmp.ne.s32.totalorder %s114, %s116
    %p120 = scmp.eq.s32.totalorder %s17, 0
    %p121 = por %p119, %p120
    %p122 = scmp.ne.s32.totalorder %s114, %s116
    %p123 = scmp.eq.s32.totalorder %s22, 1
    %p124 = por %p122, %p123
    %p125 = scmp.ne.s32.totalorder %s116, %s117
    %p126 = scmp.eq.s32.totalorder %s22, 0
    %p127 = por %p125, %p126
    %p128 = scmp.ne.s32.totalorder %s116, %s117
    %p129 = scmp.eq.s32.totalorder %s23, 1
    %p130 = por %p128, %p129
    %p132 = scmp.ne.s32.totalorder %s117, %s131
    %p133 = scmp.eq.s32.totalorder %s23, 0
    %p134 = por %p132, %p133
    %s136 = sadd.s32 %s135, 1
    %p139 = scmp.eq.s32.totalorder %s17, 1
    %p140 = scmp.ne.s32.totalorder %s135, %s137
    %p141 = scmp.eq.s32.totalorder %s17, 0
    %p142 = por %p140, %p141
    %p143 = scmp.ne.s32.totalorder %s135, %s137
    %p144 = scmp.eq.s32.totalorder %s22, 1
    %p145 = por %p143, %p144
    %p146 = scmp.ne.s32.totalorder %s137, %s138
    %p147 = scmp.eq.s32.totalorder %s22, 0
    %p148 = por %p146, %p147
    %p149 = scmp.ne.s32.totalorder %s137, %s138
    %p150 = scmp.eq.s32.totalorder %s23, 1
    %p151 = por %p149, %p150
    %p153 = scmp.ne.s32.totalorder %s138, %s152
    %p154 = scmp.eq.s32.totalorder %s23, 0
    %p155 = por %p153, %p154
    %s157 = sadd.s32 %s156, 1
    %p160 = scmp.eq.s32.totalorder %s17, 1
    %p161 = scmp.ne.s32.totalorder %s156, %s158
    %p162 = scmp.eq.s32.totalorder %s17, 0
    %p163 = por %p161, %p162
    %p164 = scmp.ne.s32.totalorder %s156, %s158
    %p165 = scmp.eq.s32.totalorder %s22, 1
    %p166 = por %p164, %p165
    %p167 = scmp.ne.s32.totalorder %s158, %s159
    %p168 = scmp.eq.s32.totalorder %s22, 0
    %p169 = por %p167, %p168
    %p170 = scmp.ne.s32.totalorder %s158, %s159
    %p171 = scmp.eq.s32.totalorder %s23, 1
    %p172 = por %p170, %p171
    %p174 = scmp.ne.s32.totalorder %s159, %s173
    %p175 = scmp.eq.s32.totalorder %s23, 0
    %p176 = por %p174, %p175
    %s178 = sadd.s32 %s177, 1
    %p181 = scmp.eq.s32.totalorder %s17, 1
    %p182 = scmp.ne.s32.totalorder %s177, %s179
    %p183 = scmp.eq.s32.totalorder %s17, 0
    %p184 = por %p182, %p183
    %p185 = scmp.ne.s32.totalorder %s177, %s179
    %p186 = scmp.eq.s32.totalorder %s22, 1
    %p187 = por %p185, %p186
    %p188 = scmp.ne.s32.totalorder %s179, %s180
    %p189 = scmp.eq.s32.totalorder %s22, 0
    %p190 = por %p188, %p189
    %p191 = scmp.ne.s32.totalorder %s179, %s180
    %p192 = scmp.eq.s32.totalorder %s23, 1
    %p193 = por %p191, %p192
    %p195 = scmp.ne.s32.totalorder %s180, %s194
    %p196 = scmp.eq.s32.totalorder %s23, 0
    %p197 = por %p195, %p196
    %s199 = sadd.s32 %s198, 1
    %p202 = scmp.eq.s32.totalorder %s17, 1
    %p203 = scmp.ne.s32.totalorder %s198, %s200
    %p204 = scmp.eq.s32.totalorder %s17, 0
    %p205 = por %p203, %p204
    %p206 = scmp.ne.s32.totalorder %s198, %s200
    %p207 = scmp.eq.s32.totalorder %s22, 1
    %p208 = por %p206, %p207
    %p209 = scmp.ne.s32.totalorder %s200, %s201
    %p210 = scmp.eq.s32.totalorder %s22, 0
    %p211 = por %p209, %p210
    %p212 = scmp.ne.s32.totalorder %s200, %s201
    %p213 = scmp.eq.s32.totalorder %s23, 1
    %p214 = por %p212, %p213
    %p216 = scmp.ne.s32.totalorder %s201, %s215
    %p217 = scmp.eq.s32.totalorder %s23, 0
    %p218 = por %p216, %p217
    %s220 = sadd.s32 %s219, 1
    %p223 = scmp.eq.s32.totalorder %s17, 1
    %p224 = scmp.ne.s32.totalorder %s219, %s221
    %p225 = scmp.eq.s32.totalorder %s17, 0
    %p226 = por %p224, %p225
    %p227 = scmp.ne.s32.totalorder %s219, %s221
    %p228 = scmp.eq.s32.totalorder %s22, 1
    %p229 = por %p227, %p228
    %p230 = scmp.ne.s32.totalorder %s221, %s222
    %p231 = scmp.eq.s32.totalorder %s22, 0
    %p232 = por %p230, %p231
    %p233 = scmp.ne.s32.totalorder %s221, %s222
    %p234 = scmp.eq.s32.totalorder %s23, 1
    %p235 = por %p233, %p234
    %p237 = scmp.ne.s32.totalorder %s222, %s236
    %p238 = scmp.eq.s32.totalorder %s23, 0
    %p239 = por %p237, %p238
    %s241 = sadd.s32 %s240, 1
    %p244 = scmp.eq.s32.totalorder %s17, 1
    %p245 = scmp.ne.s32.totalorder %s240, %s242
    %p246 = scmp.eq.s32.totalorder %s17, 0
    %p247 = por %p245, %p246
    %p248 = scmp.ne.s32.totalorder %s240, %s242
    %p249 = scmp.eq.s32.totalorder %s22, 1
    %p250 = por %p248, %p249
    %p251 = scmp.ne.s32.totalorder %s242, %s243
    %p252 = scmp.eq.s32.totalorder %s22, 0
    %p253 = por %p251, %p252
    %p254 = scmp.ne.s32.totalorder %s242, %s243
    %p255 = scmp.eq.s32.totalorder %s23, 1
    %p256 = por %p254, %p255
    %p258 = scmp.ne.s32.totalorder %s243, %s257
    %p259 = scmp.eq.s32.totalorder %s23, 0
    %p260 = por %p258, %p259
    %s261 = ssub.s32 %s17, %s24
    %p262 = scmp.eq.s32.totalorder %s261, 0
    %s264 = sadd.s32 %s263, 1
    %s265 = scalar_select %p262, %s263, %s264
    %p268 = pneg %p262
    %p269 = scmp.eq.s32.totalorder %s17, 1
    %p270 = por %p268, %p269
    %p271 = scmp.ne.s32.totalorder %s263, %s266
    %p272 = scmp.eq.s32.totalorder %s17, 0
    %p273 = por %p271, %p272
    %p274 = scmp.ne.s32.totalorder %s263, %s266
    %p275 = scmp.eq.s32.totalorder %s22, 1
    %p276 = por %p274, %p275
    %p277 = scmp.ne.s32.totalorder %s266, %s267
    %p278 = scmp.eq.s32.totalorder %s22, 0
    %p279 = por %p277, %p278
    %p280 = scmp.ne.s32.totalorder %s266, %s267
    %p281 = scmp.eq.s32.totalorder %s23, 1
    %p282 = por %p280, %p281
    %p284 = scmp.ne.s32.totalorder %s267, %s283
    %p285 = scmp.eq.s32.totalorder %s23, 0
    %p286 = por %p284, %p285
    %p287 = scmp.le.s32.totalorder 1, %s17
    %p288 = scmp.lt.s32.totalorder %s17, 3
    %p289 = pnand %p287, %p288
    %p290 = pneg %p289
    // Predicated region
    $region9: #{ddpg_actor_forward.1} parent=5 // pred_check
      _
    $region10: #{ddpg_actor_forward.1} parent=5 // pred_check_branch
      %292 = sbr.rel (%p289) target = $region12
    $region11: #{ddpg_actor_forward.1} parent=5 // pred_region
      %s293 = ssub.s32 %s17, 1
      // Predicated region
      $region13: #{ddpg_actor_forward.1} parent=11 // pred_check
        %p294 = pneg %p64
      $region14: #{ddpg_actor_forward.1} parent=11 // pred_check_branch
        %296 = sbr.rel (%p294) target = $region16
      $region15: #{ddpg_actor_forward.1} parent=11 // pred_region
        _
      $region16: #{ddpg_actor_forward.1} parent=11 // pred_fallthru
        _
      // Predicated region
      $region17: #{ddpg_actor_forward.1} parent=11 // pred_check
        %p297 = pneg %p85
      $region18: #{ddpg_actor_forward.1} parent=11 // pred_check_branch
        %299 = sbr.rel (%p297) target = $region20
      $region19: #{ddpg_actor_forward.1} parent=11 // pred_region
        _
      $region20: #{ddpg_actor_forward.1} parent=11 // pred_fallthru
        _
      // Predicated region
      $region21: #{ddpg_actor_forward.1} parent=11 // pred_check
        %p300 = pneg %p106
      $region22: #{ddpg_actor_forward.1} parent=11 // pred_check_branch
        %302 = sbr.rel (%p300) target = $region24
      $region23: #{ddpg_actor_forward.1} parent=11 // pred_region
        _
      $region24: #{ddpg_actor_forward.1} parent=11 // pred_fallthru
        _
      // Predicated region
      $region25: #{ddpg_actor_forward.1} parent=11 // pred_check
        %p303 = pneg %p127
      $region26: #{ddpg_actor_forward.1} parent=11 // pred_check_branch
        %305 = sbr.rel (%p303) target = $region28
      $region27: #{ddpg_actor_forward.1} parent=11 // pred_region
        _
      $region28: #{ddpg_actor_forward.1} parent=11 // pred_fallthru
        _
      // Predicated region
      $region29: #{ddpg_actor_forward.1} parent=11 // pred_check
        %p306 = pneg %p148
      $region30: #{ddpg_actor_forward.1} parent=11 // pred_check_branch
        %308 = sbr.rel (%p306) target = $region32
      $region31: #{ddpg_actor_forward.1} parent=11 // pred_region
        _
      $region32: #{ddpg_actor_forward.1} parent=11 // pred_fallthru
        _
      // Predicated region
      $region33: #{ddpg_actor_forward.1} parent=11 // pred_check
        %p309 = pneg %p169
      $region34: #{ddpg_actor_forward.1} parent=11 // pred_check_branch
        %311 = sbr.rel (%p309) target = $region36
      $region35: #{ddpg_actor_forward.1} parent=11 // pred_region
        _
      $region36: #{ddpg_actor_forward.1} parent=11 // pred_fallthru
        _
      // Predicated region
      $region37: #{ddpg_actor_forward.1} parent=11 // pred_check
        %p312 = pneg %p190
      $region38: #{ddpg_actor_forward.1} parent=11 // pred_check_branch
        %314 = sbr.rel (%p312) target = $region40
      $region39: #{ddpg_actor_forward.1} parent=11 // pred_region
        _
      $region40: #{ddpg_actor_forward.1} parent=11 // pred_fallthru
        _
      // Predicated region
      $region41: #{ddpg_actor_forward.1} parent=11 // pred_check
        %p315 = pneg %p211
      $region42: #{ddpg_actor_forward.1} parent=11 // pred_check_branch
        %317 = sbr.rel (%p315) target = $region44
      $region43: #{ddpg_actor_forward.1} parent=11 // pred_region
        _
      $region44: #{ddpg_actor_forward.1} parent=11 // pred_fallthru
        _
      // Predicated region
      $region45: #{ddpg_actor_forward.1} parent=11 // pred_check
        %p318 = pneg %p232
      $region46: #{ddpg_actor_forward.1} parent=11 // pred_check_branch
        %320 = sbr.rel (%p318) target = $region48
      $region47: #{ddpg_actor_forward.1} parent=11 // pred_region
        _
      $region48: #{ddpg_actor_forward.1} parent=11 // pred_fallthru
        _
      // Predicated region
      $region49: #{ddpg_actor_forward.1} parent=11 // pred_check
        %p321 = pneg %p253
      $region50: #{ddpg_actor_forward.1} parent=11 // pred_check_branch
        %323 = sbr.rel (%p321) target = $region52
      $region51: #{ddpg_actor_forward.1} parent=11 // pred_region
        _
      $region52: #{ddpg_actor_forward.1} parent=11 // pred_fallthru
        _
    $region12: #{ddpg_actor_forward.1} parent=5 // pred_fallthru
      _
    %p324 = scmp.lt.s32.totalorder %s17, 2
    // Predicated region
    $region53: #{ddpg_actor_forward.1} parent=5 // pred_check
      %p325 = pneg %p324
    $region54: #{ddpg_actor_forward.1} parent=5 // pred_check_branch
      %327 = sbr.rel (%p325) target = $region56
    $region55: #{ddpg_actor_forward.1} parent=5 // pred_region
      // Predicated region
      $region57: #{ddpg_actor_forward.1} parent=55 // pred_check
        %p328 = pneg %p37
      $region58: #{ddpg_actor_forward.1} parent=55 // pred_check_branch
        %330 = sbr.rel (%p328) target = $region60
      $region59: #{ddpg_actor_forward.1} parent=55 // pred_region
        %s331 = smul.u32 4, %s17
        %p332 = scmp.lt.s32.totalorder %s331, 7
        %s333 = scalar_select %p332, %s331, 7
        %s334 = smul.addr %s333, 4
        %s335 = scalar_lea.vmem %s0, %s334
        %s336 = smul.u32 4, %s17
      $region60: #{ddpg_actor_forward.1} parent=55 // pred_fallthru
        _
    $region56: #{ddpg_actor_forward.1} parent=5 // pred_fallthru
      _
    %p337 = scmp.le.s32.totalorder 1, %s17
    %p338 = scmp.lt.s32.totalorder %s17, 3
    %p339 = pnand %p337, %p338
    %p340 = pneg %p339
    // Predicated region
    $region61: #{ddpg_actor_forward.1} parent=5 // pred_check
      _
    $region62: #{ddpg_actor_forward.1} parent=5 // pred_check_branch
      %342 = sbr.rel (%p339) target = $region64
    $region63: #{ddpg_actor_forward.1} parent=5 // pred_region
      %s343 = ssub.s32 %s17, 1
      %s344 = smul.u32 4, %s22
      %p345 = scmp.lt.s32.totalorder %s344, 7
      %s346 = scalar_select %p345, %s344, 7
      %s347 = smul.addr %s346, 4
      %s348 = scalar_lea.vmem %s0, %s347
      %p349 = pneg %p43
      %p350 = pneg %p40
      %p351 = pneg %p64
      %p352 = pneg %p61
      %p353 = pneg %p85
      %p354 = pneg %p82
      %p355 = pneg %p106
      %p356 = pneg %p103
      %p357 = pneg %p127
      %p358 = pneg %p124
      %p359 = pneg %p148
      %p360 = pneg %p145
      %p361 = pneg %p169
      %p362 = pneg %p166
      %p363 = pneg %p190
      %p364 = pneg %p187
      %p365 = pneg %p211
      %p366 = pneg %p208
      %p367 = pneg %p232
      %p368 = pneg %p229
      %p369 = pneg %p253
      %p370 = pneg %p250
      %p371 = pneg %p279
      %p372 = pneg %p276
      %s373 = smul.u32 4, %s22
      %p374 = scmp.lt.s32.totalorder %s373, 7
      %s375 = scalar_select %p374, %s373, 7
      %s376 = smul.addr %s375, 8
      %s377 = scalar_lea.vmem %s11, %s376
      %s378 = smul.u32 4, %s22
      %p379 = scmp.lt.s32.totalorder %s378, 7
      %s380 = scalar_select %p379, %s378, 7
      %s381 = smul.addr %s380, 4
      %s382 = scalar_lea.vmem %s0, %s381
      %s383 = smul.u32 4, %s22
      %s384 = smul.u32 4, %s22
      %p385 = scmp.lt.s32.totalorder %s384, 7
      %s386 = scalar_select %p385, %s384, 7
      %s387 = smul.addr %s386, 8
      %s388 = scalar_lea.vmem %s11, %s387
      %s389 = smul.u32 4, %s22
      %v391 = vld [vmem:[%s382] sm:$0xf]
      %v392 = vld [vmem:[%s382 + $0x4] sm:$0xf]
      %v393 = vld [vmem:[%s382 + $0x8] sm:$0xf]
      %v394 = vld [vmem:[%s382 + $0xc] sm:$0xf]
      %v395 = vld [vmem:[%s1] sm:$0xf]
      %v396 = vld [vmem:[%s1 + $0x4] sm:$0xf]
      %v397 = vld [vmem:[%s1 + $0x8] sm:$0xf]
      %v398 = vld [vmem:[%s1 + $0xc] sm:$0xf]
      %v399 = vld [vmem:[%s1 + $0x10] sm:$0x1]
      %v400 = vld [vmem:[%s2] sm:$0x1]
      %v402 = vlaneseq
      %v403 = vshrl.u32 %v402, 7
      %v404 = vsub.s32 0, %v403
      %v405 = vrot.slane %v400, %v404
      %v411 = vunpack.c.l.b16 %v391
      %v412 = vunpack.c.l.b16 %v392
      %v413 = vunpack.c.l.b16 %v393
      %v414 = vunpack.c.l.b16 %v394
      %v415 = vpack.c.b16 %v412, %v411
      %v416 = vpack.c.b16 %v414, %v413
      %v422 = vunpack.c.l.b16 %v395
      %v423 = vunpack.c.l.b16 %v396
      %v424 = vunpack.c.l.b16 %v397
      %v425 = vunpack.c.l.b16 %v398
      %v426 = vunpack.c.l.b16 %v399
      %v427 = vpack.c.b16 %v423, %v422
      %v428 = vpack.c.b16 %v425, %v424
      %v429 = vpack.c.b16 %v426, %v426
      %vm432 = vcmask 269312
      %v434 = vsel %vm432, %v415, 0
      %v437 = vsel %vm432, %v416, 0
      %vm439 = vcmask 1040384
      %v440 = vsel 0, 4294967295, 65535
      %v441 = vsel %vm439, %v440, 0
      %v443 = vand.u32 %v429, %v441
      %445 = vmatprep.subr.bf16.mxu0 0
      %446 = vmatpush1.bf16.msra.mxu0 %v427
      %447 = vmatprep.subr.bf16.mxu0 0
      %448 = vmatpush1.bf16.msra.mxu0 %v428
      %449 = vmatprep.subr.bf16.mxu0 0
      %450 = vmatpush1.bf16.msra.mxu0 %v443
      %451 = vmatprep.subr.bf16.mxu0 0
      %452 = vmatpush1.bf16.msra.mxu0 0
      %453 = vmatprep.subr.bf16.mxu0 0
      %454 = vmatpush1.bf16.msra.mxu0 0
      %455 = vmatprep.subr.bf16.mxu0 0
      %456 = vmatpush1.bf16.msra.mxu0 0
      %457 = vmatprep.subr.bf16.mxu0 0
      %458 = vmatpush1.bf16.msra.mxu0 0
      %459 = vmatprep.subr.bf16.mxu0 0
      %460 = vmatpush1.bf16.msra.mxu0 0
      %461 = vmatprep.subr.bf16.mxu0 0
      %462 = vmatpush1.bf16.msra.mxu0 0
      %463 = vmatprep.subr.bf16.mxu0 0
      %464 = vmatpush1.bf16.msra.mxu0 0
      %465 = vmatprep.subr.bf16.mxu0 0
      %466 = vmatpush1.bf16.msra.mxu0 0
      %467 = vmatprep.subr.bf16.mxu0 0
      %468 = vmatpush1.bf16.msra.mxu0 0
      %469 = vmatprep.subr.bf16.mxu0 0
      %470 = vmatpush1.bf16.msra.mxu0 0
      %471 = vmatprep.subr.bf16.mxu0 0
      %472 = vmatpush1.bf16.msra.mxu0 0
      %473 = vmatprep.subr.bf16.mxu0 0
      %474 = vmatpush1.bf16.msra.mxu0 0
      %475 = vmatprep.subr.bf16.mxu0 0
      %476 = vmatpush1.bf16.msra.mxu0 0
      %477 = vmatprep.mubr.bf16.mxu0 0
      %478 = vmatmul.mubr.bf16.gmra.mrb[0].mxu0 %v434
      %v479 = vpop.f32.mrb[0].mxu0
      %v480 = vadd.f32 %v405, %v479
      %v481 = vpop.f32.mrb[0].mxu0
      %v482 = vpop.f32.mrb[0].mxu0
      %v483 = vadd.f32 %v405, %v482
      %v484 = vpop.f32.mrb[0].mxu0
      %485 = vmatprep.mubr.bf16.mxu0 0
      %486 = vmatmul.mubr.bf16.gmra.mrb[0].mxu0 %v437
      %v487 = vpop.f32.mrb[0].mxu0
      %v488 = vadd.f32 %v405, %v487
      %v489 = vpop.f32.mrb[0].mxu0
      %v490 = vpop.f32.mrb[0].mxu0
      %v491 = vadd.f32 %v405, %v490
      %v492 = vpop.f32.mrb[0].mxu0
      %493 = vdwg.mxu0
      %v494 = vmax.f32 %v480, 0.0
      %v495 = vmax.f32 %v483, 0.0
      %v496 = vmax.f32 %v488, 0.0
      %v497 = vmax.f32 %v491, 0.0
      %v498 = vpack.c.bf16 %v495, %v494
      %v499 = vpack.c.bf16 %v497, %v496
      %v500 = vld [vmem:[%s3] sm:$0xf]
      %v501 = vld [vmem:[%s3 + $0x4] sm:$0xf]
      %v502 = vld [vmem:[%s3 + $0x8] sm:$0xf]
      %v503 = vld [vmem:[%s3 + $0xc] sm:$0xf]
      %v504 = vld [vmem:[%s3 + $0x10] sm:$0xf]
      %v505 = vld [vmem:[%s3 + $0x14] sm:$0xf]
      %v506 = vld [vmem:[%s3 + $0x18] sm:$0xf]
      %v507 = vld [vmem:[%s3 + $0x1c] sm:$0xf]
      %v508 = vld [vmem:[%s3 + $0x20] sm:$0xf]
      %v509 = vld [vmem:[%s3 + $0x24] sm:$0xf]
      %v510 = vld [vmem:[%s3 + $0x28] sm:$0xf]
      %v511 = vld [vmem:[%s3 + $0x2c] sm:$0xf]
      %v512 = vld [vmem:[%s3 + $0x30] sm:$0xf]
      %v513 = vld [vmem:[%s3 + $0x34] sm:$0xf]
      %v514 = vld [vmem:[%s3 + $0x38] sm:$0xf]
      %v515 = vld [vmem:[%s3 + $0x3c] sm:$0xf]
      %v516 = vld [vmem:[%s4] sm:$0x1]
      %v518 = vlaneseq
      %v519 = vshrl.u32 %v518, 7
      %v520 = vsub.s32 0, %v519
      %v521 = vrot.slane %v516, %v520
      %v539 = vunpack.c.l.b16 %v500
      %v540 = vunpack.c.l.b16 %v501
      %v541 = vunpack.c.l.b16 %v502
      %v542 = vunpack.c.l.b16 %v503
      %v543 = vunpack.c.l.b16 %v504
      %v544 = vunpack.c.l.b16 %v505
      %v545 = vunpack.c.l.b16 %v506
      %v546 = vunpack.c.l.b16 %v507
      %v547 = vunpack.c.l.b16 %v508
      %v548 = vunpack.c.l.b16 %v509
      %v549 = vunpack.c.l.b16 %v510
      %v550 = vunpack.c.l.b16 %v511
      %v551 = vunpack.c.l.b16 %v512
      %v552 = vunpack.c.l.b16 %v513
      %v553 = vunpack.c.l.b16 %v514
      %v554 = vunpack.c.l.b16 %v515
      %v555 = vpack.c.b16 %v540, %v539
      %v556 = vpack.c.b16 %v542, %v541
      %v557 = vpack.c.b16 %v544, %v543
      %v558 = vpack.c.b16 %v546, %v545
      %v559 = vpack.c.b16 %v548, %v547
      %v560 = vpack.c.b16 %v550, %v549
      %v561 = vpack.c.b16 %v552, %v551
      %v562 = vpack.c.b16 %v554, %v553
      %571 = vmatprep.subr.bf16.mxu0 0
      %572 = vmatpush1.bf16.msra.mxu0 %v555
      %573 = vmatprep.subr.bf16.mxu0 0
      %574 = vmatpush1.bf16.msra.mxu0 %v556
      %575 = vmatprep.subr.bf16.mxu0 0
      %576 = vmatpush1.bf16.msra.mxu0 %v557
      %577 = vmatprep.subr.bf16.mxu0 0
      %578 = vmatpush1.bf16.msra.mxu0 %v558
      %579 = vmatprep.subr.bf16.mxu0 0
      %580 = vmatpush1.bf16.msra.mxu0 %v559
      %581 = vmatprep.subr.bf16.mxu0 0
      %582 = vmatpush1.bf16.msra.mxu0 %v560
      %583 = vmatprep.subr.bf16.mxu0 0
      %584 = vmatpush1.bf16.msra.mxu0 %v561
      %585 = vmatprep.subr.bf16.mxu0 0
      %586 = vmatpush1.bf16.msra.mxu0 %v562
      %587 = vmatprep.subr.bf16.mxu0 0
      %588 = vmatpush1.bf16.msra.mxu0 0
      %589 = vmatprep.subr.bf16.mxu0 0
      %590 = vmatpush1.bf16.msra.mxu0 0
      %591 = vmatprep.subr.bf16.mxu0 0
      %592 = vmatpush1.bf16.msra.mxu0 0
      %593 = vmatprep.subr.bf16.mxu0 0
      %594 = vmatpush1.bf16.msra.mxu0 0
      %595 = vmatprep.subr.bf16.mxu0 0
      %596 = vmatpush1.bf16.msra.mxu0 0
      %597 = vmatprep.subr.bf16.mxu0 0
      %598 = vmatpush1.bf16.msra.mxu0 0
      %599 = vmatprep.subr.bf16.mxu0 0
      %600 = vmatpush1.bf16.msra.mxu0 0
      %601 = vmatprep.subr.bf16.mxu0 0
      %602 = vmatpush1.bf16.msra.mxu0 0
      %603 = vmatprep.mubr.bf16.mxu0 0
      %604 = vmatmul.mubr.bf16.gmra.mrb[0].mxu0 %v498
      %v605 = vpop.f32.mrb[0].mxu0
      %v606 = vadd.f32 %v521, %v605
      %v607 = vpop.f32.mrb[0].mxu0
      %v608 = vpop.f32.mrb[0].mxu0
      %v609 = vadd.f32 %v521, %v608
      %v610 = vpop.f32.mrb[0].mxu0
      %611 = vmatprep.mubr.bf16.mxu0 0
      %612 = vmatmul.mubr.bf16.gmra.mrb[0].mxu0 %v499
      %v613 = vpop.f32.mrb[0].mxu0
      %v614 = vadd.f32 %v521, %v613
      %v615 = vpop.f32.mrb[0].mxu0
      %v616 = vpop.f32.mrb[0].mxu0
      %v617 = vadd.f32 %v521, %v616
      %v618 = vpop.f32.mrb[0].mxu0
      %619 = vdwg.mxu0
      %v620 = vmax.f32 %v606, 0.0
      %v621 = vmax.f32 %v609, 0.0
      %v622 = vmax.f32 %v614, 0.0
      %v623 = vmax.f32 %v617, 0.0
      %v624 = vpack.c.bf16 %v621, %v620
      %v625 = vpack.c.bf16 %v623, %v622
      %v626 = vld [vmem:[%s5] sm:$0xf]
      %v627 = vld [vmem:[%s5 + $0x4] sm:$0xf]
      %v628 = vld [vmem:[%s5 + $0x8] sm:$0xf]
      %v629 = vld [vmem:[%s5 + $0xc] sm:$0xf]
      %v630 = vld [vmem:[%s5 + $0x10] sm:$0xf]
      %v631 = vld [vmem:[%s5 + $0x14] sm:$0xf]
      %v632 = vld [vmem:[%s5 + $0x18] sm:$0xf]
      %v633 = vld [vmem:[%s5 + $0x1c] sm:$0xf]
      %v634 = vld [vmem:[%s5 + $0x20] sm:$0xf]
      %v635 = vld [vmem:[%s5 + $0x24] sm:$0xf]
      %v636 = vld [vmem:[%s5 + $0x28] sm:$0xf]
      %v637 = vld [vmem:[%s5 + $0x2c] sm:$0xf]
      %v638 = vld [vmem:[%s5 + $0x30] sm:$0xf]
      %v639 = vld [vmem:[%s5 + $0x34] sm:$0xf]
      %v640 = vld [vmem:[%s5 + $0x38] sm:$0xf]
      %v641 = vld [vmem:[%s5 + $0x3c] sm:$0xf]
      %v642 = vld [vmem:[%s6] sm:$0x1]
      %v644 = vlaneseq
      %v645 = vshrl.u32 %v644, 7
      %v646 = vsub.s32 0, %v645
      %v647 = vrot.slane %v642, %v646
      %v665 = vunpack.c.l.b16 %v626
      %v666 = vunpack.c.l.b16 %v627
      %v667 = vunpack.c.l.b16 %v628
      %v668 = vunpack.c.l.b16 %v629
      %v669 = vunpack.c.l.b16 %v630
      %v670 = vunpack.c.l.b16 %v631
      %v671 = vunpack.c.l.b16 %v632
      %v672 = vunpack.c.l.b16 %v633
      %v673 = vunpack.c.l.b16 %v634
      %v674 = vunpack.c.l.b16 %v635
      %v675 = vunpack.c.l.b16 %v636
      %v676 = vunpack.c.l.b16 %v637
      %v677 = vunpack.c.l.b16 %v638
      %v678 = vunpack.c.l.b16 %v639
      %v679 = vunpack.c.l.b16 %v640
      %v680 = vunpack.c.l.b16 %v641
      %v681 = vpack.c.b16 %v666, %v665
      %v682 = vpack.c.b16 %v668, %v667
      %v683 = vpack.c.b16 %v670, %v669
      %v684 = vpack.c.b16 %v672, %v671
      %v685 = vpack.c.b16 %v674, %v673
      %v686 = vpack.c.b16 %v676, %v675
      %v687 = vpack.c.b16 %v678, %v677
      %v688 = vpack.c.b16 %v680, %v679
      %697 = vmatprep.subr.bf16.mxu0 0
      %698 = vmatpush1.bf16.msra.mxu0 %v681
      %699 = vmatprep.subr.bf16.mxu0 0
      %700 = vmatpush1.bf16.msra.mxu0 %v682
      %701 = vmatprep.subr.bf16.mxu0 0
      %702 = vmatpush1.bf16.msra.mxu0 %v683
      %703 = vmatprep.subr.bf16.mxu0 0
      %704 = vmatpush1.bf16.msra.mxu0 %v684
      %705 = vmatprep.subr.bf16.mxu0 0
      %706 = vmatpush1.bf16.msra.mxu0 %v685
      %707 = vmatprep.subr.bf16.mxu0 0
      %708 = vmatpush1.bf16.msra.mxu0 %v686
      %709 = vmatprep.subr.bf16.mxu0 0
      %710 = vmatpush1.bf16.msra.mxu0 %v687
      %711 = vmatprep.subr.bf16.mxu0 0
      %712 = vmatpush1.bf16.msra.mxu0 %v688
      %713 = vmatprep.subr.bf16.mxu0 0
      %714 = vmatpush1.bf16.msra.mxu0 0
      %715 = vmatprep.subr.bf16.mxu0 0
      %716 = vmatpush1.bf16.msra.mxu0 0
      %717 = vmatprep.subr.bf16.mxu0 0
      %718 = vmatpush1.bf16.msra.mxu0 0
      %719 = vmatprep.subr.bf16.mxu0 0
      %720 = vmatpush1.bf16.msra.mxu0 0
      %721 = vmatprep.subr.bf16.mxu0 0
      %722 = vmatpush1.bf16.msra.mxu0 0
      %723 = vmatprep.subr.bf16.mxu0 0
      %724 = vmatpush1.bf16.msra.mxu0 0
      %725 = vmatprep.subr.bf16.mxu0 0
      %726 = vmatpush1.bf16.msra.mxu0 0
      %727 = vmatprep.subr.bf16.mxu0 0
      %728 = vmatpush1.bf16.msra.mxu0 0
      %729 = vmatprep.mubr.bf16.mxu0 0
      %730 = vmatmul.mubr.bf16.gmra.mrb[0].mxu0 %v624
      %v731 = vpop.f32.mrb[0].mxu0
      %v732 = vadd.f32 %v647, %v731
      %v733 = vpop.f32.mrb[0].mxu0
      %v734 = vpop.f32.mrb[0].mxu0
      %v735 = vadd.f32 %v647, %v734
      %v736 = vpop.f32.mrb[0].mxu0
      %737 = vmatprep.mubr.bf16.mxu0 0
      %738 = vmatmul.mubr.bf16.gmra.mrb[0].mxu0 %v625
      %v739 = vpop.f32.mrb[0].mxu0
      %v740 = vadd.f32 %v647, %v739
      %v741 = vpop.f32.mrb[0].mxu0
      %v742 = vpop.f32.mrb[0].mxu0
      %v743 = vadd.f32 %v647, %v742
      %v744 = vpop.f32.mrb[0].mxu0
      %745 = vdwg.mxu0
      %v746 = vmax.f32 %v732, 0.0
      %v747 = vmax.f32 %v735, 0.0
      %v748 = vmax.f32 %v740, 0.0
      %v749 = vmax.f32 %v743, 0.0
      %v750 = vpack.c.bf16 %v747, %v746
      %v751 = vpack.c.bf16 %v749, %v748
      %v752 = vld [vmem:[%s7] sm:$0xf]
      %v753 = vld [vmem:[%s7 + $0x4] sm:$0xf]
      %v754 = vld [vmem:[%s7 + $0x8] sm:$0xf]
      %v755 = vld [vmem:[%s7 + $0xc] sm:$0xf]
      %v756 = vld [vmem:[%s7 + $0x10] sm:$0xf]
      %v757 = vld [vmem:[%s7 + $0x14] sm:$0xf]
      %v758 = vld [vmem:[%s7 + $0x18] sm:$0xf]
      %v759 = vld [vmem:[%s7 + $0x1c] sm:$0xf]
      %v760 = vld [vmem:[%s8] sm:$0x1]
      %v762 = vlaneseq
      %v763 = vshrl.u32 %v762, 7
      %v764 = vsub.s32 0, %v763
      %v765 = vrot.slane %v760, %v764
      %v775 = vunpack.c.l.b16 %v752
      %v776 = vunpack.c.l.b16 %v753
      %v777 = vunpack.c.l.b16 %v754
      %v778 = vunpack.c.l.b16 %v755
      %v779 = vunpack.c.l.b16 %v756
      %v780 = vunpack.c.l.b16 %v757
      %v781 = vunpack.c.l.b16 %v758
      %v782 = vunpack.c.l.b16 %v759
      %v783 = vpack.c.b16 %v776, %v775
      %v784 = vpack.c.b16 %v778, %v777
      %v785 = vpack.c.b16 %v780, %v779
      %v786 = vpack.c.b16 %v782, %v781
      %vm791 = vcmask 523264
      %v793 = vsel %vm791, %v750, 0
      %v796 = vsel %vm791, %v751, 0
      %798 = vmatprep.subr.bf16.mxu0 0
      %799 = vmatpush1.bf16.msra.mxu0 %v783
      %800 = vmatprep.subr.bf16.mxu0 0
      %801 = vmatpush1.bf16.msra.mxu0 %v784
      %802 = vmatprep.subr.bf16.mxu0 0
      %803 = vmatpush1.bf16.msra.mxu0 %v785
      %804 = vmatprep.subr.bf16.mxu0 0
      %805 = vmatpush1.bf16.msra.mxu0 %v786
      %806 = vmatprep.subr.bf16.mxu0 0
      %807 = vmatpush1.bf16.msra.mxu0 0
      %808 = vmatprep.subr.bf16.mxu0 0
      %809 = vmatpush1.bf16.msra.mxu0 0
      %810 = vmatprep.subr.bf16.mxu0 0
      %811 = vmatpush1.bf16.msra.mxu0 0
      %812 = vmatprep.subr.bf16.mxu0 0
      %813 = vmatpush1.bf16.msra.mxu0 0
      %814 = vmatprep.subr.bf16.mxu0 0
      %815 = vmatpush1.bf16.msra.mxu0 0
      %816 = vmatprep.subr.bf16.mxu0 0
      %817 = vmatpush1.bf16.msra.mxu0 0
      %818 = vmatprep.subr.bf16.mxu0 0
      %819 = vmatpush1.bf16.msra.mxu0 0
      %820 = vmatprep.subr.bf16.mxu0 0
      %821 = vmatpush1.bf16.msra.mxu0 0
      %822 = vmatprep.subr.bf16.mxu0 0
      %823 = vmatpush1.bf16.msra.mxu0 0
      %824 = vmatprep.subr.bf16.mxu0 0
      %825 = vmatpush1.bf16.msra.mxu0 0
      %826 = vmatprep.subr.bf16.mxu0 0
      %827 = vmatpush1.bf16.msra.mxu0 0
      %828 = vmatprep.subr.bf16.mxu0 0
      %829 = vmatpush1.bf16.msra.mxu0 0
      %830 = vmatprep.mubr.bf16.mxu0 0
      %831 = vmatmul.mubr.bf16.gmra.mrb[0].mxu0 %v793
      %v832 = vpop.f32.mrb[0].mxu0
      %v833 = vadd.f32 %v765, %v832
      %v834 = vpop.f32.mrb[0].mxu0
      %v835 = vpop.f32.mrb[0].mxu0
      %v836 = vadd.f32 %v765, %v835
      %v837 = vpop.f32.mrb[0].mxu0
      %838 = vmatprep.mubr.bf16.mxu0 0
      %839 = vmatmul.mubr.bf16.gmra.mrb[0].mxu0 %v796
      %v840 = vpop.f32.mrb[0].mxu0
      %v841 = vadd.f32 %v765, %v840
      %v842 = vpop.f32.mrb[0].mxu0
      %v843 = vpop.f32.mrb[0].mxu0
      %v844 = vadd.f32 %v765, %v843
      %v845 = vpop.f32.mrb[0].mxu0
      %846 = vdwg.mxu0
      %v847 = vmax.f32 %v833, 0.0
      %v848 = vmax.f32 %v836, 0.0
      %v849 = vmax.f32 %v841, 0.0
      %v850 = vmax.f32 %v844, 0.0
      %v851 = vpack.c.bf16 %v848, %v847
      %v852 = vpack.c.bf16 %v850, %v849
      %v853 = vld [vmem:[%s9] sm:$0xf]
      %v854 = vld [vmem:[%s9 + $0x4] sm:$0xf]
      %v855 = vld [vmem:[%s9 + $0x8] sm:$0xf]
      %v856 = vld [vmem:[%s9 + $0xc] sm:$0xf]
      %v857 = vld [vmem:[%s9 + $0x10] sm:$0xf]
      %v858 = vld [vmem:[%s9 + $0x14] sm:$0xf]
      %v859 = vld [vmem:[%s9 + $0x18] sm:$0xf]
      %v860 = vld [vmem:[%s9 + $0x1c] sm:$0xf]
      %v861 = vld [vmem:[%s10] sm:$0x1]
      %v863 = vlaneseq
      %v864 = vshrl.u32 %v863, 7
      %v865 = vsub.s32 0, %v864
      %v866 = vrot.slane %v861, %v865
      %v876 = vunpack.c.l.b16 %v853
      %v877 = vunpack.c.l.b16 %v854
      %v878 = vunpack.c.l.b16 %v855
      %v879 = vunpack.c.l.b16 %v856
      %v880 = vunpack.c.l.b16 %v857
      %v881 = vunpack.c.l.b16 %v858
      %v882 = vunpack.c.l.b16 %v859
      %v883 = vunpack.c.l.b16 %v860
      %v884 = vpack.c.b16 %v877, %v876
      %v885 = vpack.c.b16 %v879, %v878
      %v886 = vpack.c.b16 %v881, %v880
      %v887 = vpack.c.b16 %v883, %v882
      %v893 = vsel %vm791, %v851, 0
      %v896 = vsel %vm791, %v852, 0
      %898 = vmatprep.subr.bf16.mxu0 0
      %899 = vmatpush1.bf16.msra.mxu0 %v884
      %900 = vmatprep.subr.bf16.mxu0 0
      %901 = vmatpush1.bf16.msra.mxu0 %v885
      %902 = vmatprep.subr.bf16.mxu0 0
      %903 = vmatpush1.bf16.msra.mxu0 %v886
      %904 = vmatprep.subr.bf16.mxu0 0
      %905 = vmatpush1.bf16.msra.mxu0 %v887
      %906 = vmatprep.subr.bf16.mxu0 0
      %907 = vmatpush1.bf16.msra.mxu0 0
      %908 = vmatprep.subr.bf16.mxu0 0
      %909 = vmatpush1.bf16.msra.mxu0 0
      %910 = vmatprep.subr.bf16.mxu0 0
      %911 = vmatpush1.bf16.msra.mxu0 0
      %912 = vmatprep.subr.bf16.mxu0 0
      %913 = vmatpush1.bf16.msra.mxu0 0
      %914 = vmatprep.subr.bf16.mxu0 0
      %915 = vmatpush1.bf16.msra.mxu0 0
      %916 = vmatprep.subr.bf16.mxu0 0
      %917 = vmatpush1.bf16.msra.mxu0 0
      %918 = vmatprep.subr.bf16.mxu0 0
      %919 = vmatpush1.bf16.msra.mxu0 0
      %920 = vmatprep.subr.bf16.mxu0 0
      %921 = vmatpush1.bf16.msra.mxu0 0
      %922 = vmatprep.subr.bf16.mxu0 0
      %923 = vmatpush1.bf16.msra.mxu0 0
      %924 = vmatprep.subr.bf16.mxu0 0
      %925 = vmatpush1.bf16.msra.mxu0 0
      %926 = vmatprep.subr.bf16.mxu0 0
      %927 = vmatpush1.bf16.msra.mxu0 0
      %928 = vmatprep.subr.bf16.mxu0 0
      %929 = vmatpush1.bf16.msra.mxu0 0
      %930 = vmatprep.mubr.bf16.mxu0 0
      %931 = vmatmul.mubr.bf16.gmra.mrb[0].mxu0 %v893
      %v932 = vpop.f32.mrb[0].mxu0
      %v933 = vadd.f32 %v866, %v932
      %v934 = vpop.f32.mrb[0].mxu0
      %v935 = vpop.f32.mrb[0].mxu0
      %v936 = vadd.f32 %v866, %v935
      %v937 = vpop.f32.mrb[0].mxu0
      %938 = vmatprep.mubr.bf16.mxu0 0
      %939 = vmatmul.mubr.bf16.gmra.mrb[0].mxu0 %v896
      %v940 = vpop.f32.mrb[0].mxu0
      %v941 = vadd.f32 %v866, %v940
      %v942 = vpop.f32.mrb[0].mxu0
      %v943 = vpop.f32.mrb[0].mxu0
      %v944 = vadd.f32 %v866, %v943
      %v945 = vpop.f32.mrb[0].mxu0
      %946 = vdwg.mxu0
      %v947 = vtanh.pop %v933
      %v948 = vtanh.pop %v936
      %v949 = vtanh.pop %v941
      %v950 = vtanh.pop %v944
      %vm951 = vcmask 31744
      %952 = vst.msk [vmem:[%s388] sm:$0xff] %vm951, %v947
      %953 = vst.msk [vmem:[%s388 + $0x8] sm:$0xff] %vm951, %v948
      %954 = vst.msk [vmem:[%s388 + $0x10] sm:$0xff] %vm951, %v949
      %955 = vst.msk [vmem:[%s388 + $0x18] sm:$0xff] %vm951, %v950
      %s956 = smul.u32 4, %s22
      %p957 = scmp.lt.s32.totalorder %s956, 7
      %s958 = scalar_select %p957, %s956, 7
      %s959 = smul.addr %s958, 8
      %s960 = scalar_lea.vmem %s11, %s959
      // Predicated region
      $region65: #{ddpg_actor_forward.1} parent=63 // pred_check
        %p961 = pneg %p276
      $region66: #{ddpg_actor_forward.1} parent=63 // pred_check_branch
        %963 = sbr.rel (%p961) target = $region68
      $region67: #{ddpg_actor_forward.1} parent=63 // pred_region
        %s964 = smul.u32 4, %s22
      $region68: #{ddpg_actor_forward.1} parent=63 // pred_fallthru
        _
    $region64: #{ddpg_actor_forward.1} parent=5 // pred_fallthru
      _
    %p965 = scmp.le.s32.totalorder 2, %s17
    // Predicated region
    $region69: #{ddpg_actor_forward.1} parent=5 // pred_check
      %p966 = pneg %p965
    $region70: #{ddpg_actor_forward.1} parent=5 // pred_check_branch
      %968 = sbr.rel (%p966) target = $region72
    $region71: #{ddpg_actor_forward.1} parent=5 // pred_region
      %s969 = ssub.s32 %s17, 2
      // Predicated region
      $region73: #{ddpg_actor_forward.1} parent=71 // pred_check
        %p970 = pneg %p282
      $region74: #{ddpg_actor_forward.1} parent=71 // pred_check_branch
        %972 = sbr.rel (%p970) target = $region76
      $region75: #{ddpg_actor_forward.1} parent=71 // pred_region
        %s973 = smul.u32 4, %s23
        %p974 = scmp.lt.s32.totalorder %s973, 7
        %s975 = scalar_select %p974, %s973, 7
        %s976 = smul.addr %s975, 8
        %s977 = scalar_lea.vmem %s11, %s976
      $region76: #{ddpg_actor_forward.1} parent=71 // pred_fallthru
        _
    $region72: #{ddpg_actor_forward.1} parent=5 // pred_fallthru
      _
  $region6: #{ddpg_actor_forward.1} parent=0 // loop_footer
    %s21 = sadd.s32 1, %s17
  $region7: #{ddpg_actor_forward.1} parent=0 // loop_footer_branch
    %16 = sbr.rel target = $region3
  $region8: #{ddpg_actor_forward.1} parent=0 // loop_exit
    _

</llo_original>
